<compile_context>
chip_gen: v5e
topology: v5e:2x2
jax: 0.10.0
libtpu: 0.0.40
codegen_flags: <defaults>
</compile_context>

<pallas_src>
import jax
import jax.numpy as jnp
from jax.experimental import pallas as pl
from jax.experimental.pallas import tpu as pltpu

SAMPLES_PER_ROW = 32          # 32 samples x 4 features = 128 lanes per row
TR_CAP = 4096                 # rows per tile -> 128K samples, ~8 MiB double-buffered VMEM


def folded_mlp_kernel(wsel_ref, b_ref, x_ref, o_ref):
    # wsel_ref: VMEM (128, 32) f32 folded-weight / segment-sum selection matrix
    # b_ref:    SMEM (1,)      f32 folded bias
    # x_ref:    VMEM (TR, 128) f32 -- 32 interleaved samples per row
    # o_ref:    VMEM (TR, 32)  f32 -- one result per sample
    acc = jnp.dot(x_ref[...], wsel_ref[...], preferred_element_type=jnp.float32)
    o_ref[...] = (acc + b_ref[0]).astype(o_ref.dtype)


def net_forward(x, w1, b1, w2, b2, *, use_pallas=None):
    """x: (B, 4) f32; weights stored as (in, out) so semantics match nn.Linear."""
    B = x.shape[0]
    x = x.astype(jnp.float32)

    # Fold the two affine layers (module has no nonlinearity between them): exact algebra.
    w = (w1 @ w2).reshape(4).astype(jnp.float32)          # (4,)
    b = (b1 @ w2 + b2).reshape(1).astype(jnp.float32)     # (1,)

    if use_pallas is None:
        use_pallas = B >= 8192            # small-batch fast path: plain fused XLA pass
    if not use_pallas:
        return x @ w.reshape(4, 1) + b

    # Pad samples to a whole number of 128-lane rows (multiple of 32 samples); copies
    # only when B is unaligned. Keep at least 8 rows so blocks are (8k, 128)-shaped.
    rows = -(-B // SAMPLES_PER_ROW)
    rows = max(rows, 8)
    Bp = rows * SAMPLES_PER_ROW
    if Bp != B:
        x = jnp.pad(x, ((0, Bp - B), (0, 0)))
    x2 = x.reshape(rows, 4 * SAMPLES_PER_ROW)   # bitcast reshape: no data movement

    # Wsel[4*j + f, j] = w[f]  ->  out[r, j] = sum_f x2[r, 4j+f] * w[f]
    wsel = (jnp.eye(SAMPLES_PER_ROW, dtype=jnp.float32)[:, None, :]
            * w[None, :, None]).reshape(4 * SAMPLES_PER_ROW, SAMPLES_PER_ROW)

    if rows <= TR_CAP:
        tr, num_tiles = rows, 1
    else:
        tr, num_tiles = TR_CAP, -(-rows // TR_CAP)   # edge block handled by Pallas masking

    out2 = pl.pallas_call(
        folded_mlp_kernel,
        out_shape=jax.ShapeDtypeStruct((rows, SAMPLES_PER_ROW), jnp.float32),
        grid=(num_tiles,),
        in_specs=[
            pl.BlockSpec((4 * SAMPLES_PER_ROW, SAMPLES_PER_ROW), lambda i: (0, 0)),  # wsel (resident)
            pl.BlockSpec(memory_space=pltpu.MemorySpace.SMEM),                       # folded bias
            pl.BlockSpec((tr, 4 * SAMPLES_PER_ROW), lambda i: (i, 0)),               # x tile
        ],
        out_specs=pl.BlockSpec((tr, SAMPLES_PER_ROW), lambda i: (i, 0)),
        compiler_params=pltpu.CompilerParams(
            dimension_semantics=("parallel",),        # megacore sharding on v7x
        ),
    )(wsel, b, x2)                                    # (rows, 32), sample order when flattened

    return out2.reshape(Bp, 1)[:B]


def init_params(key):
    # Deterministic init mimicking nn.Linear's uniform(-1/sqrt(fan_in), 1/sqrt(fan_in)).
    k1, k2, k3, k4 = jax.random.split(key, 4)
    bound1 = 1.0 / jnp.sqrt(4.0)
    bound2 = 1.0 / jnp.sqrt(3.0)
    w1 = jax.random.uniform(k1, (4, 3), jnp.float32, -bound1, bound1)  # (in, out)
    b1 = jax.random.uniform(k2, (1, 3), jnp.float32, -bound1, bound1)
    w2 = jax.random.uniform(k3, (3, 1), jnp.float32, -bound2, bound2)
    b2 = jax.random.uniform(k4, (1, 1), jnp.float32, -bound2, bound2)
    return w1, b1, w2, b2


if __name__ == "__main__":
    key = jax.random.PRNGKey(0)
    kx, kp = jax.random.split(key)
    B = 8
    x = jax.random.normal(kx, (B, 4), jnp.float32)
    w1, b1, w2, b2 = init_params(kp)

    # Reference in plain JAX (unfolded, matches the PyTorch module exactly).
    ref = (x @ w1 + b1) @ w2 + b2

    # Force the Pallas path so the kernel itself is exercised at this small batch.
    out = jax.block_until_ready(net_forward(x, w1, b1, w2, b2, use_pallas=True))
    assert out.shape == (B, 1)
    assert jnp.allclose(out, ref, atol=1e-5), "pallas path mismatch vs reference"

    # Also exercise the small-batch XLA fast path (the default for B this small).
    out_fast = jax.block_until_ready(net_forward(x, w1, b1, w2, b2))
    assert jnp.allclose(out_fast, ref, atol=1e-5), "fast path mismatch vs reference"

    print("KERNEL_OK")
</pallas_src>

<mosaic_0001>
module attributes {stable_mosaic.version = 11 : i64} {
  func.func @folded_mlp_kernel(%arg0: i32, %arg1: memref<128x32xf32, #tpu.memory_space<vmem>>, %arg2: memref<1xf32, #tpu.memory_space<smem>>, %arg3: memref<8x128xf32, #tpu.memory_space<vmem>>, %arg4: memref<8x32xf32, #tpu.memory_space<vmem>>) attributes {dimension_semantics = [#tpu.dimension_semantics<parallel>], iteration_bounds = array<i64: 1>, scalar_prefetch = 0 : i64, scratch_operands = 0 : i64, tpu.core_type = #tpu.core_type<tc>, window_params = [{pipeline_mode = #tpu.pipeline_mode<synchronous>, transform_indices = @transform_0, window_bounds = array<i64: 128, 32>}, {transform_indices = @transform_1, window_bounds = array<i64: 1>}, {transform_indices = @transform_2, window_bounds = array<i64: 8, 128>}, {transform_indices = @transform_3, window_bounds = array<i64: 8, 32>}]} {
    %c0 = arith.constant 0 : index
    %c0_0 = arith.constant 0 : index
    %0 = vector.load %arg3[%c0, %c0_0] : memref<8x128xf32, #tpu.memory_space<vmem>>, vector<8x128xf32>
    %c0_1 = arith.constant 0 : index
    %c0_2 = arith.constant 0 : index
    %1 = vector.load %arg1[%c0_1, %c0_2] : memref<128x32xf32, #tpu.memory_space<vmem>>, vector<128x32xf32>
    %cst = arith.constant dense<0.000000e+00> : vector<8x32xf32>
    %2 = tpu.matmul %0, %1, %cst {dimension_numbers = #tpu.dot_dimension_numbers<[1], [0], [0], [1], [0, 0, 1, 1], [], []>} : vector<8x128xf32>, vector<128x32xf32>, vector<8x32xf32> -> vector<8x32xf32>
    %c0_3 = arith.constant 0 : index
    %3 = memref.load %arg2[%c0_3] : memref<1xf32, #tpu.memory_space<smem>>
    %4 = vector.broadcast %3 : f32 to vector<8x32xf32>
    %5 = arith.addf %2, %4 : vector<8x32xf32>
    %c0_4 = arith.constant 0 : index
    %c0_5 = arith.constant 0 : index
    %6 = vector.load %arg4[%c0_4, %c0_5] : memref<8x32xf32, #tpu.memory_space<vmem>>, vector<8x32xf32>
    tpu.vector_store %arg4[%c0_4, %c0_5], %5 {strides = array<i32>} : memref<8x32xf32, #tpu.memory_space<vmem>>, vector<8x32xf32>,
    return
  }
  func.func @transform_0(%arg0: i32) -> (i32, i32) {
    %c0_i32 = arith.constant 0 : i32
    %c0_i32_0 = arith.constant 0 : i32
    %c0_i32_1 = arith.constant 0 : i32
    return %c0_i32, %c0_i32_0 : i32, i32
  }
  func.func @transform_1(%arg0: i32) -> i32 {
    %c0_i32 = arith.constant 0 : i32
    %c0_i32_0 = arith.constant 0 : i32
    return %c0_i32 : i32
  }
  func.func @transform_2(%arg0: i32) -> (i32, i32) {
    %c0_i32 = arith.constant 0 : i32
    %c0_i32_0 = arith.constant 0 : i32
    return %arg0, %c0_i32 : i32, i32
  }
  func.func @transform_3(%arg0: i32) -> (i32, i32) {
    %c0_i32 = arith.constant 0 : i32
    %c0_i32_0 = arith.constant 0 : i32
    return %arg0, %c0_i32 : i32, i32
  }
}

</mosaic_0001>

<llo_original>
// kernel: tpu_custom_call.1
$region0: #{tpu_custom_call.1}
  #allocation0 [shape = 'u32[]', space=smem, size = 0x4, offset = 0x4, fixed_abs, tag = 'smem constant byte address 0x4 - core index']
  #allocation1 [shape = 'u32[72,128]{1,0:T(1,128)}', space=vmem, size = 0x9000, scoped, tag = 'internal scratch']
  #allocation2 [shape = 'f32[1]{0:T(128)S(6)}', space=smem, size = 0x200, scoped, tag = 'scoped memory for tpu_custom_call.1']
  %s0 = inlined_call_operand.vmem [shape: f32[128,32], index: 0, kind: input, shape index: {}]
  %s1 = inlined_call_operand.<no memory space> [shape: f32[1], index: 1, kind: input, shape index: {}]
  %s2 = inlined_call_operand.vmem [shape: f32[8,128], index: 2, kind: input, shape index: {}]
  %s3 = inlined_call_operand.hbm [shape: f32[8,32], index: 3, kind: output, shape index: {}]
  %s4 = sld [smem:[#allocation0]]
  $region22: #{tpu_custom_call.1} parent=0
    _
  %s6 = ssub.s32 1, %s4
  %s7 = scalar_select 0, %s6, %s4
  %8 = sst [smem:[#allocation2]] %s1
  $region1: #{tpu_custom_call.1} parent=0
    #allocation3 [shape = 'u8[4096]{0}', space=vmem, size = 0x1000, scoped, tag = 'output window, operand 0, single buffered']
    #allocation4 [shape = 's32[1]{0}', space=sflag, size = 0x4, scoped, tag = 'scoped memory for tpu_custom_call.1']
    %9 = vsyncpa [#allocation4], 0
    // Predicated region
    $region2: #{tpu_custom_call.1} parent=1 // pred_check
      _
    $region3: #{tpu_custom_call.1} parent=1 // pred_check_branch
      %11 = sbr.rel (0) target = $region5
    $region4: #{tpu_custom_call.1} parent=1 // pred_region
      _
    $region5: #{tpu_custom_call.1} parent=1 // pred_fallthru
      _
    // Predicated region
    $region6: #{tpu_custom_call.1} parent=1 // pred_check
      _
    $region7: #{tpu_custom_call.1} parent=1 // pred_check_branch
      %13 = sbr.rel (0) target = $region9
    $region8: #{tpu_custom_call.1} parent=1 // pred_region
      _
    $region9: #{tpu_custom_call.1} parent=1 // pred_fallthru
      _
    // Predicated region
    $region10: #{tpu_custom_call.1} parent=1 // pred_check
      _
    $region11: #{tpu_custom_call.1} parent=1 // pred_check_branch
      %15 = sbr.rel (0) target = $region13
    $region12: #{tpu_custom_call.1} parent=1 // pred_region
      _
    $region13: #{tpu_custom_call.1} parent=1 // pred_fallthru
      _
    %v16 = vld [vmem:[%s2] sm:$0xff]
    %v17 = vld [vmem:[%s0] sm:$0xff]
    %v18 = vld [vmem:[%s0 + $0x8] sm:$0xff]
    %v19 = vld [vmem:[%s0 + $0x10] sm:$0xff]
    %v20 = vld [vmem:[%s0 + $0x18] sm:$0xff]
    %v21 = vld [vmem:[%s0 + $0x20] sm:$0xff]
    %v22 = vld [vmem:[%s0 + $0x28] sm:$0xff]
    %v23 = vld [vmem:[%s0 + $0x30] sm:$0xff]
    %v24 = vld [vmem:[%s0 + $0x38] sm:$0xff]
    %v25 = vld [vmem:[%s0 + $0x40] sm:$0xff]
    %v26 = vld [vmem:[%s0 + $0x48] sm:$0xff]
    %v27 = vld [vmem:[%s0 + $0x50] sm:$0xff]
    %v28 = vld [vmem:[%s0 + $0x58] sm:$0xff]
    %v29 = vld [vmem:[%s0 + $0x60] sm:$0xff]
    %v30 = vld [vmem:[%s0 + $0x68] sm:$0xff]
    %v31 = vld [vmem:[%s0 + $0x70] sm:$0xff]
    %v32 = vld [vmem:[%s0 + $0x78] sm:$0xff]
    %s33 = sld [smem:[#allocation2]]
    %v34 = vstv %s33
    %35 = vmatpush.msra.mxu0 %v32
    %36 = vmatpush.msra.mxu0 %v31
    %37 = vmatpush.msra.mxu0 %v30
    %38 = vmatpush.msra.mxu0 %v29
    %39 = vmatpush.msra.mxu0 %v28
    %40 = vmatpush.msra.mxu0 %v27
    %41 = vmatpush.msra.mxu0 %v26
    %42 = vmatpush.msra.mxu0 %v25
    %43 = vmatpush.msra.mxu0 %v24
    %44 = vmatpush.msra.mxu0 %v23
    %45 = vmatpush.msra.mxu0 %v22
    %46 = vmatpush.msra.mxu0 %v21
    %47 = vmatpush.msra.mxu0 %v20
    %48 = vmatpush.msra.mxu0 %v19
    %49 = vmatpush.msra.mxu0 %v18
    %50 = vmatpush.msra.mxu0 %v17
    %51 = vmatmul.f32.gmra.mxu0 %v16
    %v52 = vpop.f32.mrf.mxu0
    %v53 = vadd.f32 %v34, %v52
    %54 = vdwg.mxu0
    %vm55 = vcmask 261120
    %56 = vst.msk [vmem:[#allocation3] sm:$0xff] %vm55, %v53
    // Predicated region
    $region14: #{tpu_custom_call.1} parent=1 // pred_check
      _
    $region15: #{tpu_custom_call.1} parent=1 // pred_check_branch
      %58 = sbr.rel (0) target = $region17
    $region16: #{tpu_custom_call.1} parent=1 // pred_region
      %60 = vsyncadd [#allocation4], 0
      %s62 = sshll.u32 [#allocation3], 4
      %s63 = int_to_ptr.vmem [resolvable:$true] %s62
      %s64 = sshll.u32 %s3, 4
      %s65 = int_to_ptr.hbm [resolvable:$true] %s64
      %67 = dma.vmem_to_hbm [thread:$0]  %s63, 128, %s65, [#allocation4]
    $region17: #{tpu_custom_call.1} parent=1 // pred_fallthru
      _
    // Predicated region
    $region18: #{tpu_custom_call.1} parent=1 // pred_check
      _
    $region19: #{tpu_custom_call.1} parent=1 // pred_check_branch
      %69 = sbr.rel (0) target = $region21
    $region20: #{tpu_custom_call.1} parent=1 // pred_region
      %71 = dma.done [#allocation4], 128
    $region21: #{tpu_custom_call.1} parent=1 // pred_fallthru
      _
    %72 = vsyncpa [#allocation4], 1

</llo_original>
